<compile_context>
chip_gen: v7x
topology: tpu7x:2x2x1
jax: 0.10.0
libtpu: 0.0.40
codegen_flags: <defaults>
</compile_context>

<pallas_src>
import functools

import jax
import jax.numpy as jnp
from jax.experimental import pallas as pl
from jax.experimental.pallas import tpu as pltpu


def _round_up(x, m):
    return ((x + m - 1) // m) * m


def _regression_head_kernel(x_ref, wt_ref, b_ref, o_ref, *, activation):
    # x_ref: (TM, D) tile, wt_ref: (D, O_pad) resident, b_ref: (1, O_pad) resident.
    y = jnp.dot(x_ref[...], wt_ref[...], preferred_element_type=jnp.float32)
    y = y + b_ref[...]  # broadcast bias over rows
    if activation == "sigmoid":
        y = jax.nn.sigmoid(y)
    elif activation == "relu":
        y = jnp.maximum(y, 0.0)
    o_ref[...] = y.astype(o_ref.dtype)


def regression_head(x, weight, bias, activation=None):
    """x: (B, S, D); weight: (O, D); bias: (O,).  Returns (B, S, O)."""
    if activation not in (None, "sigmoid", "relu"):
        raise ValueError(f"unsupported activation: {activation!r}")

    B, S, D = x.shape
    O = weight.shape[0]
    M = B * S

    # ---- wrapper-side layout glue (no compute hoisting) ----
    LANE = 128
    O_pad = max(LANE, _round_up(O, LANE))        # lane-dense output stores
    TM = min(512, max(8, _round_up(M, 8)))       # rows per tile; fits v7x VMEM easily
    M_pad = _round_up(M, TM)
    num_tiles = M_pad // TM

    x2d = x.reshape(M, D)
    if M_pad != M:
        x2d = jnp.pad(x2d, ((0, M_pad - M), (0, 0)))
    wt = jnp.pad(weight.T, ((0, 0), (0, O_pad - O)))              # (D, O_pad)
    b2d = jnp.pad(bias.reshape(1, O), ((0, 0), (0, O_pad - O)))   # (1, O_pad)
    # NOTE: if d_model < 128 (as in the toy example, D=32) the x vregs are
    # lane-underfilled; accepted since the kernel is mem-bound and the MXU is
    # nowhere near being the bottleneck.

    kernel = functools.partial(_regression_head_kernel, activation=activation)

    # Double-buffered x/out tiles + resident weight/bias, plus headroom.
    needed_vmem = 4 * (3 * TM * D + 3 * TM * O_pad + D * O_pad + O_pad)
    vmem_limit = int(min(max(needed_vmem + (4 << 20), 16 << 20), 48 << 20))

    cost = pl.CostEstimate(
        flops=2 * M * D * O,
        transcendentals=(M * O if activation == "sigmoid" else 0),
        bytes_accessed=4 * (M * D + D * O + O + M * O),
    )

    out2d = pl.pallas_call(
        kernel,
        out_shape=jax.ShapeDtypeStruct((M_pad, O_pad), x.dtype),
        grid=(num_tiles,),
        in_specs=[
            pl.BlockSpec((TM, D), lambda i: (i, 0)),       # x: tiled over rows
            pl.BlockSpec((D, O_pad), lambda i: (0, 0)),    # W^T: VMEM-resident
            pl.BlockSpec((1, O_pad), lambda i: (0, 0)),    # bias: VMEM-resident
        ],
        out_specs=pl.BlockSpec((TM, O_pad), lambda i: (i, 0)),
        compiler_params=pltpu.CompilerParams(
            dimension_semantics=("parallel",),
            vmem_limit_bytes=vmem_limit,
        ),
        cost_estimate=cost,
    )(x2d, wt, b2d)

    return out2d[:M, :O].reshape(B, S, O)


if __name__ == "__main__":
    # Small, deterministic example consistent with the module:
    # batch=2, seq=8, d_model=32, output_dim=1
    B, S, D, O = 2, 8, 32, 1

    key = jax.random.PRNGKey(0)
    kx, kw, kb = jax.random.split(key, 3)

    x = jax.random.normal(kx, (B, S, D), dtype=jnp.float32)
    # PyTorch nn.Linear init is uniform(-1/sqrt(D), 1/sqrt(D)); mimic deterministically.
    bound = 1.0 / (D ** 0.5)
    weight = jax.random.uniform(kw, (O, D), minval=-bound, maxval=bound, dtype=jnp.float32)
    bias = jax.random.uniform(kb, (O,), minval=-bound, maxval=bound, dtype=jnp.float32)

    ok = True
    for act in (None, "sigmoid", "relu"):
        out = regression_head(x, weight, bias, activation=act)
        out = jax.block_until_ready(out)

        ref = x @ weight.T + bias
        if act == "sigmoid":
            ref = jax.nn.sigmoid(ref)
        elif act == "relu":
            ref = jnp.maximum(ref, 0.0)

        if out.shape != (B, S, O):
            ok = False
        if not jnp.allclose(out, ref, atol=1e-5, rtol=1e-5):
            ok = False

    if ok:
        print("KERNEL_OK")
</pallas_src>

<mosaic_0001>
module attributes {stable_mosaic.version = 11 : i64} {
  func.func @_regression_head_kernel(%arg0: i32, %arg1: memref<16x32xf32, #tpu.memory_space<vmem>>, %arg2: memref<32x128xf32, #tpu.memory_space<vmem>>, %arg3: memref<1x128xf32, #tpu.memory_space<vmem>>, %arg4: memref<16x128xf32, #tpu.memory_space<vmem>>) attributes {dimension_semantics = [#tpu.dimension_semantics<parallel>], iteration_bounds = array<i64: 1>, scalar_prefetch = 0 : i64, scratch_operands = 0 : i64, tpu.core_type = #tpu.core_type<tc>, window_params = [{transform_indices = @transform_0, window_bounds = array<i64: 16, 32>}, {pipeline_mode = #tpu.pipeline_mode<synchronous>, transform_indices = @transform_1, window_bounds = array<i64: 32, 128>}, {pipeline_mode = #tpu.pipeline_mode<synchronous>, transform_indices = @transform_2, window_bounds = array<i64: 1, 128>}, {transform_indices = @transform_3, window_bounds = array<i64: 16, 128>}]} {
    %c0 = arith.constant 0 : index
    %c0_0 = arith.constant 0 : index
    %0 = vector.load %arg1[%c0, %c0_0] : memref<16x32xf32, #tpu.memory_space<vmem>>, vector<16x32xf32>
    %c0_1 = arith.constant 0 : index
    %c0_2 = arith.constant 0 : index
    %1 = vector.load %arg2[%c0_1, %c0_2] : memref<32x128xf32, #tpu.memory_space<vmem>>, vector<32x128xf32>
    %cst = arith.constant dense<0.000000e+00> : vector<16x128xf32>
    %2 = tpu.matmul %0, %1, %cst {dimension_numbers = #tpu.dot_dimension_numbers<[1], [0], [0], [1], [0, 0, 1, 1], [], []>} : vector<16x32xf32>, vector<32x128xf32>, vector<16x128xf32> -> vector<16x128xf32>
    %c0_3 = arith.constant 0 : index
    %c0_4 = arith.constant 0 : index
    %3 = vector.load %arg3[%c0_3, %c0_4] : memref<1x128xf32, #tpu.memory_space<vmem>>, vector<1x128xf32>
    %4 = vector.broadcast %3 : vector<1x128xf32> to vector<16x128xf32>
    %5 = arith.addf %2, %4 : vector<16x128xf32>
    %c0_5 = arith.constant 0 : index
    %c0_6 = arith.constant 0 : index
    %6 = vector.load %arg4[%c0_5, %c0_6] : memref<16x128xf32, #tpu.memory_space<vmem>>, vector<16x128xf32>
    tpu.vector_store %arg4[%c0_5, %c0_6], %5 {strides = array<i32>} : memref<16x128xf32, #tpu.memory_space<vmem>>, vector<16x128xf32>,
    return
  }
  func.func @transform_0(%arg0: i32) -> (i32, i32) {
    %c0_i32 = arith.constant 0 : i32
    %c0_i32_0 = arith.constant 0 : i32
    return %arg0, %c0_i32 : i32, i32
  }
  func.func @transform_1(%arg0: i32) -> (i32, i32) {
    %c0_i32 = arith.constant 0 : i32
    %c0_i32_0 = arith.constant 0 : i32
    %c0_i32_1 = arith.constant 0 : i32
    return %c0_i32, %c0_i32_0 : i32, i32
  }
  func.func @transform_2(%arg0: i32) -> (i32, i32) {
    %c0_i32 = arith.constant 0 : i32
    %c0_i32_0 = arith.constant 0 : i32
    %c0_i32_1 = arith.constant 0 : i32
    return %c0_i32, %c0_i32_0 : i32, i32
  }
  func.func @transform_3(%arg0: i32) -> (i32, i32) {
    %c0_i32 = arith.constant 0 : i32
    %c0_i32_0 = arith.constant 0 : i32
    return %arg0, %c0_i32 : i32, i32
  }
}

</mosaic_0001>

<llo_original>
// kernel: tpu_custom_call.1
$region0: #{tpu_custom_call.1}
  #allocation0 [shape = 'u32[]', space=smem, size = 0x4, offset = 0x4, fixed_abs, tag = 'smem constant byte address 0x4 - core index']
  #allocation1 [shape = 'u32[144,128]{1,0:T(1,128)}', space=vmem, size = 0x12000, scoped, tag = 'internal scratch']
  %s0 = inlined_call_operand.hbm [shape: f32[16,32], index: 0, kind: input, shape index: {}]
  %s1 = inlined_call_operand.hbm [shape: f32[32,128], index: 1, kind: input, shape index: {}]
  %s2 = inlined_call_operand.vmem [shape: f32[1,128], index: 2, kind: input, shape index: {}]
  %s3 = inlined_call_operand.hbm [shape: f32[16,128], index: 3, kind: output, shape index: {}]
  %s4 = sld [smem:[#allocation0]]
  $region30: #{tpu_custom_call.1} parent=0
    _
  %s6 = ssub.s32 1, %s4
  %s7 = scalar_select 0, %s6, %s4
  $region1: #{tpu_custom_call.1} parent=0
    #allocation2 [shape = 'u8[8192]{0}', space=vmem, size = 0x2000, scoped, tag = 'input window, operand 0, single buffered']
    #allocation3 [shape = 's32[1]{0}', space=sflag, size = 0x4, scoped, tag = 'scoped memory for tpu_custom_call.1']
    #allocation4 [shape = 's32[1]{0}', space=sflag, size = 0x4, scoped, tag = 'scoped memory for tpu_custom_call.1']
    #allocation5 [shape = 'u8[16384]{0}', space=vmem, size = 0x4000, scoped, tag = 'input window, operand 1, single buffered']
    #allocation6 [shape = 's32[1]{0}', space=sflag, size = 0x4, scoped, tag = 'scoped memory for tpu_custom_call.1']
    #allocation7 [shape = 'u8[8192]{0}', space=vmem, size = 0x2000, scoped, tag = 'output window, operand 0, single buffered']
    %8 = vsyncpa [#allocation3], 0
    %9 = vsyncpa [#allocation6], 0
    %10 = vsyncpa [#allocation4], 0
    // Predicated region
    $region2: #{tpu_custom_call.1} parent=1 // pred_check
      _
    $region3: #{tpu_custom_call.1} parent=1 // pred_check_branch
      %12 = sbr.rel (0) target = $region5
    $region4: #{tpu_custom_call.1} parent=1 // pred_region
      %s14 = ssub.s32 256, 256
      %15 = vsyncadd [#allocation3], %s14
      %s16 = sshll.u32 [#allocation2], 4
      %s17 = int_to_ptr.vmem [resolvable:$true] %s16
      %22 = dma.hbm_to_vmem [thread:$0]  %s0, 256, %s17, [#allocation3], 128, 128, 8
    $region5: #{tpu_custom_call.1} parent=1 // pred_fallthru
      _
    // Predicated region
    $region6: #{tpu_custom_call.1} parent=1 // pred_check
      _
    $region7: #{tpu_custom_call.1} parent=1 // pred_check_branch
      %24 = sbr.rel (0) target = $region9
    $region8: #{tpu_custom_call.1} parent=1 // pred_region
      %s26 = ssub.s32 512, 512
      %27 = vsyncadd [#allocation6], %s26
      %s28 = sshll.u32 [#allocation5], 4
      %s29 = int_to_ptr.vmem [resolvable:$true] %s28
      %34 = dma.hbm_to_vmem [thread:$0]  %s1, 512, %s29, [#allocation6], 128, 128, 8
    $region9: #{tpu_custom_call.1} parent=1 // pred_fallthru
      _
    // Predicated region
    $region10: #{tpu_custom_call.1} parent=1 // pred_check
      _
    $region11: #{tpu_custom_call.1} parent=1 // pred_check_branch
      %36 = sbr.rel (0) target = $region13
    $region12: #{tpu_custom_call.1} parent=1 // pred_region
      _
    $region13: #{tpu_custom_call.1} parent=1 // pred_fallthru
      _
    // Predicated region
    $region14: #{tpu_custom_call.1} parent=1 // pred_check
      _
    $region15: #{tpu_custom_call.1} parent=1 // pred_check_branch
      %38 = sbr.rel (0) target = $region17
    $region16: #{tpu_custom_call.1} parent=1 // pred_region
      %39 = dma.done [#allocation3], 256
    $region17: #{tpu_custom_call.1} parent=1 // pred_fallthru
      _
    // Predicated region
    $region18: #{tpu_custom_call.1} parent=1 // pred_check
      _
    $region19: #{tpu_custom_call.1} parent=1 // pred_check_branch
      %41 = sbr.rel (0) target = $region21
    $region20: #{tpu_custom_call.1} parent=1 // pred_region
      %42 = dma.done [#allocation6], 512
    $region21: #{tpu_custom_call.1} parent=1 // pred_fallthru
      _
    %v43 = vld [vmem:[#allocation2] sm:$0xff]
    %v44 = vld [vmem:[#allocation2 + $0x8] sm:$0xff]
    %v45 = vld [vmem:[#allocation5] sm:$0xff]
    %v46 = vld [vmem:[#allocation5 + $0x8] sm:$0xff]
    %v47 = vld [vmem:[#allocation5 + $0x10] sm:$0xff]
    %v48 = vld [vmem:[#allocation5 + $0x18] sm:$0xff]
    %v49 = vld [vmem:[%s2] sm:$0x1]
    %v51 = vlaneseq
    %v52 = vshrl.u32 %v51, 7
    %v53 = vsub.s32 0, %v52
    %v54 = vrot.slane %v49, %v53
    %vm56 = vcmask 261120
    %v58 = vsel %vm56, %v43, 0
    %v61 = vsel %vm56, %v44, 0
    %63 = vmatprep.subr.mxu0 0.0
    %64 = vmatpush1.msra.mxu0 %v45
    %65 = vmatprep.subr.mxu0 0.0
    %66 = vmatpush1.msra.mxu0 %v46
    %67 = vmatprep.subr.mxu0 0.0
    %68 = vmatpush1.msra.mxu0 %v47
    %69 = vmatprep.subr.mxu0 0.0
    %70 = vmatpush1.msra.mxu0 %v48
    %71 = vmatprep.subr.mxu0 0.0
    %72 = vmatpush1.msra.mxu0 0.0
    %73 = vmatprep.subr.mxu0 0.0
    %74 = vmatpush1.msra.mxu0 0.0
    %75 = vmatprep.subr.mxu0 0.0
    %76 = vmatpush1.msra.mxu0 0.0
    %77 = vmatprep.subr.mxu0 0.0
    %78 = vmatpush1.msra.mxu0 0.0
    %79 = vmatprep.subr.mxu0 0.0
    %80 = vmatpush1.msra.mxu0 0.0
    %81 = vmatprep.subr.mxu0 0.0
    %82 = vmatpush1.msra.mxu0 0.0
    %83 = vmatprep.subr.mxu0 0.0
    %84 = vmatpush1.msra.mxu0 0.0
    %85 = vmatprep.subr.mxu0 0.0
    %86 = vmatpush1.msra.mxu0 0.0
    %87 = vmatprep.subr.mxu0 0.0
    %88 = vmatpush1.msra.mxu0 0.0
    %89 = vmatprep.subr.mxu0 0.0
    %90 = vmatpush1.msra.mxu0 0.0
    %91 = vmatprep.subr.mxu0 0.0
    %92 = vmatpush1.msra.mxu0 0.0
    %93 = vmatprep.subr.mxu0 0.0
    %94 = vmatpush1.msra.mxu0 0.0
    %95 = vmatprep.subr.mxu0 0.0
    %96 = vmatpush1.msra.mxu0 0.0
    %97 = vmatprep.subr.mxu0 0.0
    %98 = vmatpush1.msra.mxu0 0.0
    %99 = vmatprep.subr.mxu0 0.0
    %100 = vmatpush1.msra.mxu0 0.0
    %101 = vmatprep.subr.mxu0 0.0
    %102 = vmatpush1.msra.mxu0 0.0
    %103 = vmatprep.subr.mxu0 0.0
    %104 = vmatpush1.msra.mxu0 0.0
    %105 = vmatprep.subr.mxu0 0.0
    %106 = vmatpush1.msra.mxu0 0.0
    %107 = vmatprep.subr.mxu0 0.0
    %108 = vmatpush1.msra.mxu0 0.0
    %109 = vmatprep.subr.mxu0 0.0
    %110 = vmatpush1.msra.mxu0 0.0
    %111 = vmatprep.subr.mxu0 0.0
    %112 = vmatpush1.msra.mxu0 0.0
    %113 = vmatprep.subr.mxu0 0.0
    %114 = vmatpush1.msra.mxu0 0.0
    %115 = vmatprep.subr.mxu0 0.0
    %116 = vmatpush1.msra.mxu0 0.0
    %117 = vmatprep.subr.mxu0 0.0
    %118 = vmatpush1.msra.mxu0 0.0
    %119 = vmatprep.subr.mxu0 0.0
    %120 = vmatpush1.msra.mxu0 0.0
    %121 = vmatprep.subr.mxu0 0.0
    %122 = vmatpush1.msra.mxu0 0.0
    %123 = vmatprep.subr.mxu0 0.0
    %124 = vmatpush1.msra.mxu0 0.0
    %125 = vmatprep.subr.mxu0 0.0
    %126 = vmatpush1.msra.mxu0 0.0
    %127 = vmatprep.mubr.f32.mxu0 0.0
    %128 = vmatmul.mubr.f32.gmra.mrb[0].mxu0 %v58
    %v129 = vpop.f32.mrb[0].mxu0
    %v130 = vadd.f32 %v54, %v129
    %v131 = vpop.f32.mrb[0].mxu0
    %132 = vmatprep.mubr.f32.mxu0 0.0
    %133 = vmatmul.mubr.f32.gmra.mrb[0].mxu0 %v61
    %v134 = vpop.f32.mrb[0].mxu0
    %v135 = vadd.f32 %v54, %v134
    %v136 = vpop.f32.mrb[0].mxu0
    %137 = vdwg.mxu0
    %138 = vst [vmem:[#allocation7] sm:$0xff] %v130
    %139 = vst [vmem:[#allocation7 + $0x8] sm:$0xff] %v135
    // Predicated region
    $region22: #{tpu_custom_call.1} parent=1 // pred_check
      _
    $region23: #{tpu_custom_call.1} parent=1 // pred_check_branch
      %141 = sbr.rel (0) target = $region25
    $region24: #{tpu_custom_call.1} parent=1 // pred_region
      %s143 = ssub.s32 256, 256
      %144 = vsyncadd [#allocation4], %s143
      %s145 = sshll.u32 [#allocation7], 4
      %s146 = int_to_ptr.vmem [resolvable:$true] %s145
      %151 = dma.vmem_to_hbm [thread:$0]  %s146, 256, %s3, [#allocation4], 128, 128, 8
    $region25: #{tpu_custom_call.1} parent=1 // pred_fallthru
      _
    // Predicated region
    $region26: #{tpu_custom_call.1} parent=1 // pred_check
      _
    $region27: #{tpu_custom_call.1} parent=1 // pred_check_branch
      %153 = sbr.rel (0) target = $region29
    $region28: #{tpu_custom_call.1} parent=1 // pred_region
      %154 = dma.done [#allocation4], 256
    $region29: #{tpu_custom_call.1} parent=1 // pred_fallthru
      _
    %155 = vsyncpa [#allocation3], 1
    %156 = vsyncpa [#allocation6], 1
    %157 = vsyncpa [#allocation4], 1

</llo_original>
